<compile_context>
chip_gen: v7x
topology: tpu7x:2x2x1
jax: 0.10.0
libtpu: 0.0.40
codegen_flags: <defaults>
</compile_context>

<pallas_src>
import functools

import jax
import jax.numpy as jnp
import numpy as np
from jax.experimental import pallas as pl
from jax.experimental.pallas import tpu as pltpu


def _round_up(x, m):
    return (x + m - 1) // m * m


def _sparse_conv_block_kernel(x_ref, m_ref, w_ref, b_ref, xo_ref, mo_ref,
                              *, K, dilation, Wk, Lt, Cin):
    """One (batch, row-tile) grid step, flattened lane-dense layout.

    x_ref  : (1, 1, Cin_p, win_w)  bf16  zero-padded x row-window (tile+halo)
    m_ref  : (1, 1, 1,     win_w)  f32   zero-padded mask row-window
    w_ref  : (Cout, K*K*Cin_p)     bf16  conv weight, pre-scaled by 1/Cin
    b_ref  : (Cout, 1)             f32   bias
    xo_ref : (1, Cout, Lt)         f32   conv+bias+ReLU output tile
    mo_ref : (1, 1,    Lt)         f32   max-pooled mask tile
    """
    xw = x_ref[0, 0]                       # (Cin_p, win_w) bf16
    mw = m_ref[0, 0]                       # (1, win_w)     f32

    # Hoisted mask multiply: one broadcast over Cin_p, outside the tap loop.
    xm = xw * mw.astype(xw.dtype)          # (Cin_p, win_w) bf16

    # im2col: each tap is a *static* lane slice of the row-window.  The mask
    # window-sum (normaliser) and window-max (MaxPool2d) are running
    # elementwise VPU ops over the same slices (no concat, no XLU reduce).
    x_taps = []
    cnt = None
    mx = None
    for ky in range(K):
        for kx in range(K):
            off = dilation * (ky * Wk + kx)
            x_taps.append(xm[:, off:off + Lt])          # (Cin_p, Lt) bf16
            mt = mw[:, off:off + Lt]                    # (1, Lt)     f32
            cnt = mt if cnt is None else cnt + mt
            mx = mt if mx is None else jnp.maximum(mx, mt)

    # (K*K*Cin_p, Lt): 8-row, sublane-aligned chunks -> plain copies.
    patches = jnp.concatenate(x_taps, axis=0)

    # Single MXU matmul: bf16 x bf16 -> f32 accumulate.
    acc = jnp.dot(w_ref[...], patches,
                  preferred_element_type=jnp.float32)   # (Cout, Lt) f32

    # Reference: y = conv(x*m) / clamp(Cin * cnt, 1e-5).  1/Cin is folded in
    # the weights, so divide by max(cnt, 1e-5/Cin) (exactly equivalent).
    inv = pl.reciprocal(jnp.maximum(cnt, 1e-5 / Cin), approx=True)
    out = jnp.maximum(acc * inv + b_ref[...], 0.0)      # bias + ReLU

    xo_ref[...] = out[jnp.newaxis]      # unmasked lane-dense store (Lt % 128 == 0)
    mo_ref[...] = mx[jnp.newaxis]


def sparse_conv_block(x_nchw, m_nchw, weight_oihw, bias,
                      *, stride=1, padding=1, dilation=1,
                      rows_per_tile=8, vmem_limit_bytes=None):
    """SparseConvBlock forward.  NCHW in / NCHW out, like the PyTorch module.

    `rows_per_tile` (multiple of 8) sets the output rows per grid step; tune
    upward (e.g. 32-64) for production image sizes, and raise
    `vmem_limit_bytes` on v5e/v6e (128 MiB physical VMEM) for bigger tiles.
    """
    N, Cin, H, W = x_nchw.shape
    Cout, Cin_w, K, K2 = weight_oihw.shape
    assert Cin_w == Cin and K == K2
    assert m_nchw.shape == (N, 1, H, W)
    # TODO(synk): only the stride=1 path of nn.Conv2d / MaxPool2d is implemented.
    assert stride == 1, "this Pallas kernel implements the stride=1 path"
    # Zero-padded window max == MaxPool2d's -inf-padded max needs a
    # non-negative mask and every pooling window to contain >=1 real pixel.
    assert padding <= dilation * (K - 1)
    assert rows_per_tile >= 8 and rows_per_tile % 8 == 0

    d, p = dilation, padding
    Ho = H + 2 * p - d * (K - 1)
    Wo = W + 2 * p - d * (K - 1)
    assert Ho > 0 and Wo > 0

    Cin_p = _round_up(Cin, 8)             # sublane-aligned tap chunks
    Wk = _round_up(W + 2 * p, 16)         # work width (rows*Wk % 128 == 0)
    ROWS = rows_per_tile
    Ho_pad = _round_up(Ho, ROWS)
    T = Ho_pad // ROWS                    # row tiles per image
    Lt = ROWS * Wk                        # output lanes per tile, % 128 == 0
    L = Ho_pad * Wk
    halo = d * ((K - 1) * Wk + (K - 1))   # extra lanes read by the taps
    win_w = _round_up(Lt + halo, 128)     # input row-window width per tile
    P = K * K * Cin_p

    # Padded "canvas": rows [p, p+H) x cols [p, p+W) hold the data, the rest
    # is zero; enough bottom rows that the last tile's window stays in range.
    S_needed = (T - 1) * Lt + win_w
    Hp_pad = -(-S_needed // Wk)           # ceil
    S = Hp_pad * Wk

    # NOTE: for very large images this wrapper-side pad + halo-window build is
    # an extra HBM round trip of the input; it could be replaced by manual
    # DMA of the unpadded rows into a zeroed VMEM scratch inside the kernel.
    pad_hw = ((p, Hp_pad - p - H), (p, Wk - p - W))
    x_cv = jnp.pad(x_nchw, ((0, 0), (0, Cin_p - Cin)) + pad_hw)
    x_cv = x_cv.astype(jnp.bfloat16).reshape(N, Cin_p, S)
    m_cv = jnp.pad(m_nchw, ((0, 0), (0, 0)) + pad_hw)
    m_cv = m_cv.astype(jnp.float32).reshape(N, 1, S)

    # Per-row-tile input windows (tile + halo); static slices, fuse under jit.
    x_tiles = jnp.stack(
        [x_cv[:, :, t * Lt:t * Lt + win_w] for t in range(T)], axis=1)
    m_tiles = jnp.stack(
        [m_cv[:, :, t * Lt:t * Lt + win_w] for t in range(T)], axis=1)

    # Weight (O,I,K,K) -> row (ky*K+kx)*Cin_p + c, zero rows for the padded
    # channels, and the 1/Cin of the "ones conv" normalisation folded in.
    w_t = jnp.transpose(weight_oihw.astype(jnp.float32), (0, 2, 3, 1))
    w_t = jnp.pad(w_t, ((0, 0), (0, 0), (0, 0), (0, Cin_p - Cin)))
    w_f = (w_t.reshape(Cout, P) * (1.0 / Cin)).astype(jnp.bfloat16)
    b_f = bias.astype(jnp.float32).reshape(Cout, 1)

    kernel = functools.partial(_sparse_conv_block_kernel,
                               K=K, dilation=d, Wk=Wk, Lt=Lt, Cin=Cin)

    xo_f, mo_f = pl.pallas_call(
        kernel,
        out_shape=(
            jax.ShapeDtypeStruct((N, Cout, L), jnp.float32),
            jax.ShapeDtypeStruct((N, 1, L), jnp.float32),
        ),
        grid_spec=pltpu.PrefetchScalarGridSpec(
            num_scalar_prefetch=0,
            grid=(N, T),
            in_specs=[
                pl.BlockSpec((1, 1, Cin_p, win_w), lambda n, t: (n, t, 0, 0)),
                pl.BlockSpec((1, 1, 1, win_w), lambda n, t: (n, t, 0, 0)),
                pl.BlockSpec((Cout, P), lambda n, t: (0, 0)),
                pl.BlockSpec((Cout, 1), lambda n, t: (0, 0)),
            ],
            out_specs=[
                pl.BlockSpec((1, Cout, Lt), lambda n, t: (n, 0, t)),
                pl.BlockSpec((1, 1, Lt), lambda n, t: (n, 0, t)),
            ],
        ),
        compiler_params=pltpu.CompilerParams(
            dimension_semantics=("parallel", "parallel"),
            vmem_limit_bytes=vmem_limit_bytes),
    )(x_tiles, m_tiles, w_f, b_f)

    # Free reshape back to (N, C, Ho_pad, Wk), then crop the work-width /
    # row padding.  Under jit this slice fuses into downstream consumers.
    x_out = xo_f.reshape(N, Cout, Ho_pad, Wk)[:, :, :Ho, :Wo]
    m_out = mo_f.reshape(N, 1, Ho_pad, Wk)[:, :, :Ho, :Wo]
    return x_out, m_out


def _reference(x, m, weight, bias, *, stride, padding, dilation):
    """Pure-JAX (f32) reference reproducing the PyTorch forward (NCHW)."""
    K = weight.shape[-1]
    mc = jnp.broadcast_to(m, x.shape)
    xm = x * mc
    dn = jax.lax.conv_dimension_numbers(x.shape, weight.shape,
                                        ("NCHW", "OIHW", "NCHW"))
    conv = functools.partial(
        jax.lax.conv_general_dilated,
        window_strides=(stride, stride),
        padding=[(padding, padding), (padding, padding)],
        rhs_dilation=(dilation, dilation),
        dimension_numbers=dn,
        precision=jax.lax.Precision.HIGHEST)
    y = conv(xm, weight)
    cnt = conv(mc, jnp.ones_like(weight))
    cnt = jnp.clip(cnt, 1e-5, None)
    y = y / cnt + bias[None, :, None, None]
    y = jnp.maximum(y, 0.0)
    m_pool = jax.lax.reduce_window(
        m, -jnp.inf, jax.lax.max,
        window_dimensions=(1, 1, K, K),
        window_strides=(1, 1, stride, stride),
        padding=((0, 0), (0, 0), (padding, padding), (padding, padding)),
        window_dilation=(1, 1, dilation, dilation))
    return y, m_pool


if __name__ == "__main__":
    # Small config consistent with the module: in=4, out=8, k=3, stride=1, pad=1.
    N, Cin, Cout, H, W, K = 2, 4, 8, 16, 16, 3
    stride, padding, dilation = 1, 1, 1

    key = jax.random.PRNGKey(0)
    k_x, k_m, k_w, k_b = jax.random.split(key, 4)
    x = jax.random.normal(k_x, (N, Cin, H, W), dtype=jnp.float32)
    m = jax.random.bernoulli(k_m, 0.7, (N, 1, H, W)).astype(jnp.float32)

    # Parameters mirroring the module (kaiming_normal_ fan_out / relu); the
    # bias is made non-zero purely to exercise the bias path.
    fan_out = Cout * K * K
    w_std = float(np.sqrt(2.0 / fan_out))
    weight = jax.random.normal(k_w, (Cout, Cin, K, K), dtype=jnp.float32) * w_std
    bias = 0.1 * jax.random.normal(k_b, (Cout,), dtype=jnp.float32)

    fwd = jax.jit(functools.partial(
        sparse_conv_block, stride=stride, padding=padding, dilation=dilation))
    x_out, m_out = fwd(x, m, weight, bias)
    jax.block_until_ready((x_out, m_out))

    # Sanity check against a pure-JAX f32 reference of the PyTorch forward.
    # x / weight travel in bf16 on the matmul path -> bf16-level tolerance.
    x_ref, m_ref = _reference(x, m, weight, bias,
                              stride=stride, padding=padding, dilation=dilation)
    np.testing.assert_allclose(np.asarray(x_out), np.asarray(x_ref),
                               rtol=2e-2, atol=2e-2)
    np.testing.assert_allclose(np.asarray(m_out), np.asarray(m_ref),
                               rtol=1e-6, atol=1e-6)

    print("KERNEL_OK")
</pallas_src>

<mosaic_0001>
module attributes {stable_mosaic.version = 11 : i64} {
  func.func @_sparse_conv_block_kernel(%arg0: i32, %arg1: i32, %arg2: memref<1x1x8x384xbf16, #tpu.memory_space<vmem>>, %arg3: memref<1x1x1x384xf32, #tpu.memory_space<vmem>>, %arg4: memref<8x72xbf16, #tpu.memory_space<vmem>>, %arg5: memref<8x1xf32, #tpu.memory_space<vmem>>, %arg6: memref<1x8x256xf32, #tpu.memory_space<vmem>>, %arg7: memref<1x1x256xf32, #tpu.memory_space<vmem>>) attributes {dimension_semantics = [#tpu.dimension_semantics<parallel>, #tpu.dimension_semantics<parallel>], iteration_bounds = array<i64: 2, 2>, scalar_prefetch = 0 : i64, scratch_operands = 0 : i64, tpu.core_type = #tpu.core_type<tc>, window_params = [{transform_indices = @transform_0, window_bounds = array<i64: 1, 1, 8, 384>}, {transform_indices = @transform_1, window_bounds = array<i64: 1, 1, 1, 384>}, {pipeline_mode = #tpu.pipeline_mode<synchronous>, transform_indices = @transform_2, window_bounds = array<i64: 8, 72>}, {pipeline_mode = #tpu.pipeline_mode<synchronous>, transform_indices = @transform_3, window_bounds = array<i64: 8, 1>}, {transform_indices = @transform_4, window_bounds = array<i64: 1, 8, 256>}, {transform_indices = @transform_5, window_bounds = array<i64: 1, 1, 256>}]} {
    %c0 = arith.constant 0 : index
    %c0_0 = arith.constant 0 : index
    %c0_1 = arith.constant 0 : index
    %c0_2 = arith.constant 0 : index
    %0 = vector.load %arg2[%c0, %c0_0, %c0_1, %c0_2] : memref<1x1x8x384xbf16, #tpu.memory_space<vmem>>, vector<1x1x8x384xbf16>
    %1 = vector.shape_cast %0 : vector<1x1x8x384xbf16> to vector<8x384xbf16>
    %c0_3 = arith.constant 0 : index
    %c0_4 = arith.constant 0 : index
    %c0_5 = arith.constant 0 : index
    %c0_6 = arith.constant 0 : index
    %2 = vector.load %arg3[%c0_3, %c0_4, %c0_5, %c0_6] : memref<1x1x1x384xf32, #tpu.memory_space<vmem>>, vector<1x1x1x384xf32>
    %3 = vector.shape_cast %2 : vector<1x1x1x384xf32> to vector<1x384xf32>
    %4 = arith.truncf %3 : vector<1x384xf32> to vector<1x384xbf16>
    %5 = vector.broadcast %4 : vector<1x384xbf16> to vector<8x384xbf16>
    %6 = arith.mulf %1, %5 : vector<8x384xbf16>
    %7 = vector.extract_strided_slice %6 {offsets = [0, 0], sizes = [8, 256], strides = [1, 1]} : vector<8x384xbf16> to vector<8x256xbf16>
    %8 = vector.extract_strided_slice %3 {offsets = [0, 0], sizes = [1, 256], strides = [1, 1]} : vector<1x384xf32> to vector<1x256xf32>
    %9 = vector.extract_strided_slice %6 {offsets = [0, 1], sizes = [8, 256], strides = [1, 1]} : vector<8x384xbf16> to vector<8x256xbf16>
    %10 = vector.extract_strided_slice %3 {offsets = [0, 1], sizes = [1, 256], strides = [1, 1]} : vector<1x384xf32> to vector<1x256xf32>
    %11 = arith.addf %8, %10 : vector<1x256xf32>
    %12 = arith.maximumf %8, %10 : vector<1x256xf32>
    %13 = vector.extract_strided_slice %6 {offsets = [0, 2], sizes = [8, 256], strides = [1, 1]} : vector<8x384xbf16> to vector<8x256xbf16>
    %14 = vector.extract_strided_slice %3 {offsets = [0, 2], sizes = [1, 256], strides = [1, 1]} : vector<1x384xf32> to vector<1x256xf32>
    %15 = arith.addf %11, %14 : vector<1x256xf32>
    %16 = arith.maximumf %12, %14 : vector<1x256xf32>
    %17 = vector.extract_strided_slice %6 {offsets = [0, 32], sizes = [8, 256], strides = [1, 1]} : vector<8x384xbf16> to vector<8x256xbf16>
    %18 = vector.extract_strided_slice %3 {offsets = [0, 32], sizes = [1, 256], strides = [1, 1]} : vector<1x384xf32> to vector<1x256xf32>
    %19 = arith.addf %15, %18 : vector<1x256xf32>
    %20 = arith.maximumf %16, %18 : vector<1x256xf32>
    %21 = vector.extract_strided_slice %6 {offsets = [0, 33], sizes = [8, 256], strides = [1, 1]} : vector<8x384xbf16> to vector<8x256xbf16>
    %22 = vector.extract_strided_slice %3 {offsets = [0, 33], sizes = [1, 256], strides = [1, 1]} : vector<1x384xf32> to vector<1x256xf32>
    %23 = arith.addf %19, %22 : vector<1x256xf32>
    %24 = arith.maximumf %20, %22 : vector<1x256xf32>
    %25 = vector.extract_strided_slice %6 {offsets = [0, 34], sizes = [8, 256], strides = [1, 1]} : vector<8x384xbf16> to vector<8x256xbf16>
    %26 = vector.extract_strided_slice %3 {offsets = [0, 34], sizes = [1, 256], strides = [1, 1]} : vector<1x384xf32> to vector<1x256xf32>
    %27 = arith.addf %23, %26 : vector<1x256xf32>
    %28 = arith.maximumf %24, %26 : vector<1x256xf32>
    %29 = vector.extract_strided_slice %6 {offsets = [0, 64], sizes = [8, 256], strides = [1, 1]} : vector<8x384xbf16> to vector<8x256xbf16>
    %30 = vector.extract_strided_slice %3 {offsets = [0, 64], sizes = [1, 256], strides = [1, 1]} : vector<1x384xf32> to vector<1x256xf32>
    %31 = arith.addf %27, %30 : vector<1x256xf32>
    %32 = arith.maximumf %28, %30 : vector<1x256xf32>
    %33 = vector.extract_strided_slice %6 {offsets = [0, 65], sizes = [8, 256], strides = [1, 1]} : vector<8x384xbf16> to vector<8x256xbf16>
    %34 = vector.extract_strided_slice %3 {offsets = [0, 65], sizes = [1, 256], strides = [1, 1]} : vector<1x384xf32> to vector<1x256xf32>
    %35 = arith.addf %31, %34 : vector<1x256xf32>
    %36 = arith.maximumf %32, %34 : vector<1x256xf32>
    %37 = vector.extract_strided_slice %6 {offsets = [0, 66], sizes = [8, 256], strides = [1, 1]} : vector<8x384xbf16> to vector<8x256xbf16>
    %38 = vector.extract_strided_slice %3 {offsets = [0, 66], sizes = [1, 256], strides = [1, 1]} : vector<1x384xf32> to vector<1x256xf32>
    %39 = arith.addf %35, %38 : vector<1x256xf32>
    %40 = arith.maximumf %36, %38 : vector<1x256xf32>
    %41 = tpu.concatenate %7, %9, %13, %17, %21, %25, %29, %33, %37 in 0 : vector<8x256xbf16>, vector<8x256xbf16>, vector<8x256xbf16>, vector<8x256xbf16>, vector<8x256xbf16>, vector<8x256xbf16>, vector<8x256xbf16>, vector<8x256xbf16>, vector<8x256xbf16> -> vector<72x256xbf16>
    %c0_7 = arith.constant 0 : index
    %c0_8 = arith.constant 0 : index
    %42 = vector.load %arg4[%c0_7, %c0_8] : memref<8x72xbf16, #tpu.memory_space<vmem>>, vector<8x72xbf16>
    %cst = arith.constant dense<0.000000e+00> : vector<8x256xf32>
    %43 = tpu.matmul %42, %41, %cst {dimension_numbers = #tpu.dot_dimension_numbers<[1], [0], [0], [1], [0, 0, 1, 1], [], []>} : vector<8x72xbf16>, vector<72x256xbf16>, vector<8x256xf32> -> vector<8x256xf32>
    %cst_9 = arith.constant 2.500000e-06 : f32
    %44 = vector.broadcast %cst_9 : f32 to vector<1x256xf32>
    %45 = arith.maximumf %39, %44 : vector<1x256xf32>
    %46 = tpu.reciprocal %45 {approx = true} : vector<1x256xf32> -> vector<1x256xf32>
    %47 = vector.broadcast %46 : vector<1x256xf32> to vector<8x256xf32>
    %48 = arith.mulf %43, %47 : vector<8x256xf32>
    %c0_10 = arith.constant 0 : index
    %c0_11 = arith.constant 0 : index
    %49 = vector.load %arg5[%c0_10, %c0_11] : memref<8x1xf32, #tpu.memory_space<vmem>>, vector<8x1xf32>
    %50 = vector.broadcast %49 : vector<8x1xf32> to vector<8x256xf32>
    %51 = arith.addf %48, %50 : vector<8x256xf32>
    %cst_12 = arith.constant 0.000000e+00 : f32
    %52 = vector.broadcast %cst_12 : f32 to vector<8x256xf32>
    %53 = arith.maximumf %51, %52 : vector<8x256xf32>
    %54 = vector.shape_cast %53 : vector<8x256xf32> to vector<1x8x256xf32>
    %c0_13 = arith.constant 0 : index
    %c0_14 = arith.constant 0 : index
    %c0_15 = arith.constant 0 : index
    %55 = vector.load %arg6[%c0_13, %c0_14, %c0_15] : memref<1x8x256xf32, #tpu.memory_space<vmem>>, vector<1x8x256xf32>
    tpu.vector_store %arg6[%c0_13, %c0_14, %c0_15], %54 {strides = array<i32>} : memref<1x8x256xf32, #tpu.memory_space<vmem>>, vector<1x8x256xf32>,
    %56 = vector.shape_cast %40 : vector<1x256xf32> to vector<1x1x256xf32>
    %c0_16 = arith.constant 0 : index
    %c0_17 = arith.constant 0 : index
    %c0_18 = arith.constant 0 : index
    %57 = vector.load %arg7[%c0_16, %c0_17, %c0_18] : memref<1x1x256xf32, #tpu.memory_space<vmem>>, vector<1x1x256xf32>
    tpu.vector_store %arg7[%c0_16, %c0_17, %c0_18], %56 {strides = array<i32>} : memref<1x1x256xf32, #tpu.memory_space<vmem>>, vector<1x1x256xf32>,
    return
  }
  func.func @transform_0(%arg0: i32, %arg1: i32) -> (i32, i32, i32, i32) {
    %c0_i32 = arith.constant 0 : i32
    %c0_i32_0 = arith.constant 0 : i32
    %c0_i32_1 = arith.constant 0 : i32
    return %arg0, %arg1, %c0_i32, %c0_i32_0 : i32, i32, i32, i32
  }
  func.func @transform_1(%arg0: i32, %arg1: i32) -> (i32, i32, i32, i32) {
    %c0_i32 = arith.constant 0 : i32
    %c0_i32_0 = arith.constant 0 : i32
    %c0_i32_1 = arith.constant 0 : i32
    return %arg0, %arg1, %c0_i32, %c0_i32_0 : i32, i32, i32, i32
  }
  func.func @transform_2(%arg0: i32, %arg1: i32) -> (i32, i32) {
    %c0_i32 = arith.constant 0 : i32
    %c0_i32_0 = arith.constant 0 : i32
    %c0_i32_1 = arith.constant 0 : i32
    return %c0_i32, %c0_i32_0 : i32, i32
  }
  func.func @transform_3(%arg0: i32, %arg1: i32) -> (i32, i32) {
    %c0_i32 = arith.constant 0 : i32
    %c0_i32_0 = arith.constant 0 : i32
    %c0_i32_1 = arith.constant 0 : i32
    return %c0_i32, %c0_i32_0 : i32, i32
  }
  func.func @transform_4(%arg0: i32, %arg1: i32) -> (i32, i32, i32) {
    %c0_i32 = arith.constant 0 : i32
    %c0_i32_0 = arith.constant 0 : i32
    return %arg0, %c0_i32, %arg1 : i32, i32, i32
  }
  func.func @transform_5(%arg0: i32, %arg1: i32) -> (i32, i32, i32) {
    %c0_i32 = arith.constant 0 : i32
    %c0_i32_0 = arith.constant 0 : i32
    return %arg0, %c0_i32, %arg1 : i32, i32, i32
  }
}

</mosaic_0001>

<llo_original>
// kernel: sparse_conv_block.1
$region0: #{sparse_conv_block.1}
  #allocation0 [shape = 'u32[]', space=smem, size = 0x4, offset = 0x4, fixed_abs, tag = 'smem constant byte address 0x4 - core index']
  #allocation1 [shape = 'u32[144,128]{1,0:T(1,128)}', space=vmem, size = 0x12000, scoped, tag = 'internal scratch']
  %s0 = inlined_call_operand.vmem [shape: bf16[2,2,8,384], index: 0, kind: input, shape index: {}]
  %s1 = inlined_call_operand.vmem [shape: f32[2,2,1,384], index: 1, kind: input, shape index: {}]
  %s2 = inlined_call_operand.vmem [shape: bf16[8,72], index: 2, kind: input, shape index: {}]
  %s3 = inlined_call_operand.vmem [shape: f32[8,1], index: 3, kind: input, shape index: {}]
  %s4 = inlined_call_operand.vmem [shape: f32[2,8,512], index: 4, kind: output, shape index: {0}]
  %s5 = inlined_call_operand.vmem [shape: f32[2,1,512], index: 5, kind: output, shape index: {1}]
  %6 = xla_tuple %s4, %s5
  %s7 = sld [smem:[#allocation0]]
  $region57: #{sparse_conv_block.1} parent=0
    _
  %s9 = ssub.s32 1, %s7
  %s10 = scalar_select 0, %s9, %s7
  loop: start=0, step=1, limit=6
  $region2: #{sparse_conv_block.1} parent=0 // loop_pre_header
    _
  $region3: #{sparse_conv_block.1} parent=0 // loop_header
    %s12 = sphi 0, %s16
    %p13 = scmp.ge.s32.totalorder %s12, 6
    %s19 = sphi 0, %s31
    %s20 = sphi 0, %s27
    %s21 = sphi 0, %s19
    %s22 = sphi 0, %s20
    %s23 = sphi 0, %s21
    %s24 = sphi 0, %s22
    %s36 = sphi 0, %s38
    %s39 = sphi 0, %s36
    %s40 = sphi 0, %s39
    %s56 = sphi 0, %s40
    %s64 = sphi 0, %s66
    %s67 = sphi 0, %s64
    %s68 = sphi 0, %s67
    %s84 = sphi 0, %s68
    %s88 = sphi 0, %s88
    %s90 = sphi 0, %s88
    %s91 = sphi 0, %s90
    %s105 = sphi 0, %s91
    %s109 = sphi 0, %s109
    %s111 = sphi 0, %s109
    %s112 = sphi 0, %s111
    %s126 = sphi 0, %s112
    %s134 = sphi 0, %s136
    %s137 = sphi 0, %s134
    %s138 = sphi 0, %s137
    %s154 = sphi 0, %s138
    %s162 = sphi 0, %s164
    %s165 = sphi 0, %s162
    %s166 = sphi 0, %s165
    %s182 = sphi 0, %s166
  $region4: #{sparse_conv_block.1} parent=0 // loop_header_branch
    %15 = sbr.rel (%p13) target = $region8
  $region5: #{sparse_conv_block.1} parent=0 // loop_body
    %s17 = ssub.s32 %s12, 1
    %s18 = ssub.s32 %s12, 2
    %s25 = sadd.s32 1, %s20
    %p26 = scmp.ge.s32.totalorder %s25, 2
    %s27 = scalar_select %p26, 0, %s25
    %s28 = sadd.s32 1, %s19
    %s29 = scalar_select %p26, %s28, %s19
    %p30 = scmp.ge.s32.totalorder %s29, 2
    %s31 = scalar_select %p30, 0, %s29
    %s32 = ssub.s32 %s19, %s31
    %s33 = ssub.s32 %s20, %s27
    %s34 = sor.u32 %s32, %s33
    %p35 = scmp.eq.s32.totalorder %s34, 0
    %s37 = sadd.s32 %s36, 1
    %s38 = scalar_select %p35, %s36, %s37
    %p41 = pneg %p35
    %p42 = scmp.eq.s32.totalorder %s12, 3
    %p43 = por %p41, %p42
    %p44 = scmp.ne.s32.totalorder %s36, %s39
    %p45 = scmp.eq.s32.totalorder %s12, 0
    %p46 = por %p44, %p45
    %p47 = scmp.ne.s32.totalorder %s36, %s39
    %p48 = scmp.eq.s32.totalorder %s17, 3
    %p49 = por %p47, %p48
    %p50 = scmp.ne.s32.totalorder %s39, %s40
    %p51 = scmp.eq.s32.totalorder %s17, 0
    %p52 = por %p50, %p51
    %p53 = scmp.ne.s32.totalorder %s39, %s40
    %p54 = scmp.eq.s32.totalorder %s18, 3
    %p55 = por %p53, %p54
    %p57 = scmp.ne.s32.totalorder %s40, %s56
    %p58 = scmp.eq.s32.totalorder %s18, 0
    %p59 = por %p57, %p58
    %s60 = ssub.s32 %s19, %s31
    %s61 = ssub.s32 %s20, %s27
    %s62 = sor.u32 %s60, %s61
    %p63 = scmp.eq.s32.totalorder %s62, 0
    %s65 = sadd.s32 %s64, 1
    %s66 = scalar_select %p63, %s64, %s65
    %p69 = pneg %p63
    %p70 = scmp.eq.s32.totalorder %s12, 3
    %p71 = por %p69, %p70
    %p72 = scmp.ne.s32.totalorder %s64, %s67
    %p73 = scmp.eq.s32.totalorder %s12, 0
    %p74 = por %p72, %p73
    %p75 = scmp.ne.s32.totalorder %s64, %s67
    %p76 = scmp.eq.s32.totalorder %s17, 3
    %p77 = por %p75, %p76
    %p78 = scmp.ne.s32.totalorder %s67, %s68
    %p79 = scmp.eq.s32.totalorder %s17, 0
    %p80 = por %p78, %p79
    %p81 = scmp.ne.s32.totalorder %s67, %s68
    %p82 = scmp.eq.s32.totalorder %s18, 3
    %p83 = por %p81, %p82
    %p85 = scmp.ne.s32.totalorder %s68, %s84
    %p86 = scmp.eq.s32.totalorder %s18, 0
    %p87 = por %p85, %p86
    %s89 = sadd.s32 %s88, 1
    %p92 = scmp.eq.s32.totalorder %s12, 3
    %p93 = scmp.ne.s32.totalorder %s88, %s90
    %p94 = scmp.eq.s32.totalorder %s12, 0
    %p95 = por %p93, %p94
    %p96 = scmp.ne.s32.totalorder %s88, %s90
    %p97 = scmp.eq.s32.totalorder %s17, 3
    %p98 = por %p96, %p97
    %p99 = scmp.ne.s32.totalorder %s90, %s91
    %p100 = scmp.eq.s32.totalorder %s17, 0
    %p101 = por %p99, %p100
    %p102 = scmp.ne.s32.totalorder %s90, %s91
    %p103 = scmp.eq.s32.totalorder %s18, 3
    %p104 = por %p102, %p103
    %p106 = scmp.ne.s32.totalorder %s91, %s105
    %p107 = scmp.eq.s32.totalorder %s18, 0
    %p108 = por %p106, %p107
    %s110 = sadd.s32 %s109, 1
    %p113 = scmp.eq.s32.totalorder %s12, 3
    %p114 = scmp.ne.s32.totalorder %s109, %s111
    %p115 = scmp.eq.s32.totalorder %s12, 0
    %p116 = por %p114, %p115
    %p117 = scmp.ne.s32.totalorder %s109, %s111
    %p118 = scmp.eq.s32.totalorder %s17, 3
    %p119 = por %p117, %p118
    %p120 = scmp.ne.s32.totalorder %s111, %s112
    %p121 = scmp.eq.s32.totalorder %s17, 0
    %p122 = por %p120, %p121
    %p123 = scmp.ne.s32.totalorder %s111, %s112
    %p124 = scmp.eq.s32.totalorder %s18, 3
    %p125 = por %p123, %p124
    %p127 = scmp.ne.s32.totalorder %s112, %s126
    %p128 = scmp.eq.s32.totalorder %s18, 0
    %p129 = por %p127, %p128
    %s130 = ssub.s32 %s19, %s31
    %s131 = ssub.s32 %s20, %s27
    %s132 = sor.u32 %s130, %s131
    %p133 = scmp.eq.s32.totalorder %s132, 0
    %s135 = sadd.s32 %s134, 1
    %s136 = scalar_select %p133, %s134, %s135
    %p139 = pneg %p133
    %p140 = scmp.eq.s32.totalorder %s12, 3
    %p141 = por %p139, %p140
    %p142 = scmp.ne.s32.totalorder %s134, %s137
    %p143 = scmp.eq.s32.totalorder %s12, 0
    %p144 = por %p142, %p143
    %p145 = scmp.ne.s32.totalorder %s134, %s137
    %p146 = scmp.eq.s32.totalorder %s17, 3
    %p147 = por %p145, %p146
    %p148 = scmp.ne.s32.totalorder %s137, %s138
    %p149 = scmp.eq.s32.totalorder %s17, 0
    %p150 = por %p148, %p149
    %p151 = scmp.ne.s32.totalorder %s137, %s138
    %p152 = scmp.eq.s32.totalorder %s18, 3
    %p153 = por %p151, %p152
    %p155 = scmp.ne.s32.totalorder %s138, %s154
    %p156 = scmp.eq.s32.totalorder %s18, 0
    %p157 = por %p155, %p156
    %s158 = ssub.s32 %s19, %s31
    %s159 = ssub.s32 %s20, %s27
    %s160 = sor.u32 %s158, %s159
    %p161 = scmp.eq.s32.totalorder %s160, 0
    %s163 = sadd.s32 %s162, 1
    %s164 = scalar_select %p161, %s162, %s163
    %p167 = pneg %p161
    %p168 = scmp.eq.s32.totalorder %s12, 3
    %p169 = por %p167, %p168
    %p170 = scmp.ne.s32.totalorder %s162, %s165
    %p171 = scmp.eq.s32.totalorder %s12, 0
    %p172 = por %p170, %p171
    %p173 = scmp.ne.s32.totalorder %s162, %s165
    %p174 = scmp.eq.s32.totalorder %s17, 3
    %p175 = por %p173, %p174
    %p176 = scmp.ne.s32.totalorder %s165, %s166
    %p177 = scmp.eq.s32.totalorder %s17, 0
    %p178 = por %p176, %p177
    %p179 = scmp.ne.s32.totalorder %s165, %s166
    %p180 = scmp.eq.s32.totalorder %s18, 3
    %p181 = por %p179, %p180
    %p183 = scmp.ne.s32.totalorder %s166, %s182
    %p184 = scmp.eq.s32.totalorder %s18, 0
    %p185 = por %p183, %p184
    %p186 = scmp.le.s32.totalorder 1, %s12
    %p187 = scmp.lt.s32.totalorder %s12, 5
    %p188 = pnand %p186, %p187
    %p189 = pneg %p188
    // Predicated region
    $region9: #{sparse_conv_block.1} parent=5 // pred_check
      _
    $region10: #{sparse_conv_block.1} parent=5 // pred_check_branch
      %191 = sbr.rel (%p188) target = $region12
    $region11: #{sparse_conv_block.1} parent=5 // pred_region
      %s192 = ssub.s32 %s12, 1
      // Predicated region
      $region13: #{sparse_conv_block.1} parent=11 // pred_check
        %p193 = pneg %p101
      $region14: #{sparse_conv_block.1} parent=11 // pred_check_branch
        %195 = sbr.rel (%p193) target = $region16
      $region15: #{sparse_conv_block.1} parent=11 // pred_region
        _
      $region16: #{sparse_conv_block.1} parent=11 // pred_fallthru
        _
      // Predicated region
      $region17: #{sparse_conv_block.1} parent=11 // pred_check
        %p196 = pneg %p122
      $region18: #{sparse_conv_block.1} parent=11 // pred_check_branch
        %198 = sbr.rel (%p196) target = $region20
      $region19: #{sparse_conv_block.1} parent=11 // pred_region
        _
      $region20: #{sparse_conv_block.1} parent=11 // pred_fallthru
        _
    $region12: #{sparse_conv_block.1} parent=5 // pred_fallthru
      _
    %p199 = scmp.lt.s32.totalorder %s12, 4
    // Predicated region
    $region21: #{sparse_conv_block.1} parent=5 // pred_check
      %p200 = pneg %p199
    $region22: #{sparse_conv_block.1} parent=5 // pred_check_branch
      %202 = sbr.rel (%p200) target = $region24
    $region23: #{sparse_conv_block.1} parent=5 // pred_region
      // Predicated region
      $region25: #{sparse_conv_block.1} parent=23 // pred_check
        %p203 = pneg %p46
      $region26: #{sparse_conv_block.1} parent=23 // pred_check_branch
        %205 = sbr.rel (%p203) target = $region28
      $region27: #{sparse_conv_block.1} parent=23 // pred_region
        %p206 = scmp.lt.s32.totalorder %s19, 1
        %s207 = scalar_select %p206, %s19, 1
        %p208 = scmp.lt.s32.totalorder %s20, 1
        %s209 = scalar_select %p208, %s20, 1
        %s210 = smul.addr %s209, 3
        %s211 = smul.addr %s207, 6
        %s212 = sadd.s32 %s210, %s211
        %s213 = smul.addr %s212, 4
        %s214 = scalar_lea.vmem %s0, %s213
      $region28: #{sparse_conv_block.1} parent=23 // pred_fallthru
        _
      // Predicated region
      $region29: #{sparse_conv_block.1} parent=23 // pred_check
        %p215 = pneg %p74
      $region30: #{sparse_conv_block.1} parent=23 // pred_check_branch
        %217 = sbr.rel (%p215) target = $region32
      $region31: #{sparse_conv_block.1} parent=23 // pred_region
        %p218 = scmp.lt.s32.totalorder %s19, 1
        %s219 = scalar_select %p218, %s19, 1
        %p220 = scmp.lt.s32.totalorder %s20, 1
        %s221 = scalar_select %p220, %s20, 1
        %s222 = smul.addr %s221, 3
        %s223 = smul.addr %s219, 6
        %s224 = sadd.s32 %s222, %s223
        %s225 = scalar_lea.vmem %s1, %s224
      $region32: #{sparse_conv_block.1} parent=23 // pred_fallthru
        _
    $region24: #{sparse_conv_block.1} parent=5 // pred_fallthru
      _
    %p226 = scmp.le.s32.totalorder 1, %s12
    %p227 = scmp.lt.s32.totalorder %s12, 5
    %p228 = pnand %p226, %p227
    %p229 = pneg %p228
    // Predicated region
    $region33: #{sparse_conv_block.1} parent=5 // pred_check
      _
    $region34: #{sparse_conv_block.1} parent=5 // pred_check_branch
      %231 = sbr.rel (%p228) target = $region36
    $region35: #{sparse_conv_block.1} parent=5 // pred_region
      %s232 = ssub.s32 %s12, 1
      %p233 = scmp.lt.s32.totalorder %s21, 1
      %s234 = scalar_select %p233, %s21, 1
      %p235 = scmp.lt.s32.totalorder %s22, 1
      %s236 = scalar_select %p235, %s22, 1
      %s237 = smul.addr %s236, 3
      %s238 = smul.addr %s234, 6
      %s239 = sadd.s32 %s237, %s238
      %s240 = smul.addr %s239, 4
      %s241 = scalar_lea.vmem %s0, %s240
      %p242 = pneg %p52
      %p243 = pneg %p49
      %p244 = scmp.lt.s32.totalorder %s21, 1
      %s245 = scalar_select %p244, %s21, 1
      %p246 = scmp.lt.s32.totalorder %s22, 1
      %s247 = scalar_select %p246, %s22, 1
      %s248 = smul.addr %s247, 3
      %s249 = smul.addr %s245, 6
      %s250 = sadd.s32 %s248, %s249
      %s251 = scalar_lea.vmem %s1, %s250
      %p252 = pneg %p80
      %p253 = pneg %p77
      %p254 = pneg %p101
      %p255 = pneg %p98
      %p256 = pneg %p122
      %p257 = pneg %p119
      %p258 = pneg %p150
      %p259 = pneg %p147
      %s260 = smul.u32 2, %s22
      %p261 = scmp.lt.s32.totalorder %s21, 1
      %s262 = scalar_select %p261, %s21, 1
      %p263 = scmp.lt.s32.totalorder %s260, 3
      %s264 = scalar_select %p263, %s260, 3
      %s265 = smul.addr %s262, 4
      %s266 = sadd.s32 %s264, %s265
      %s267 = smul.addr %s266, 8
      %s268 = scalar_lea.vmem %s4, %s267
      %p269 = pneg %p178
      %p270 = pneg %p175
      %s271 = smul.u32 2, %s22
      %p272 = scmp.lt.s32.totalorder %s21, 1
      %s273 = scalar_select %p272, %s21, 1
      %p274 = scmp.lt.s32.totalorder %s271, 3
      %s275 = scalar_select %p274, %s271, 3
      %s276 = smul.addr %s273, 4
      %s277 = sadd.s32 %s275, %s276
      %s278 = scalar_lea.vmem %s5, %s277
      %p279 = scmp.lt.s32.totalorder %s21, 1
      %s280 = scalar_select %p279, %s21, 1
      %p281 = scmp.lt.s32.totalorder %s22, 1
      %s282 = scalar_select %p281, %s22, 1
      %s283 = smul.addr %s282, 3
      %s284 = smul.addr %s280, 6
      %s285 = sadd.s32 %s283, %s284
      %s286 = smul.addr %s285, 4
      %s287 = scalar_lea.vmem %s0, %s286
      %p288 = scmp.lt.s32.totalorder %s21, 1
      %s289 = scalar_select %p288, %s21, 1
      %p290 = scmp.lt.s32.totalorder %s22, 1
      %s291 = scalar_select %p290, %s22, 1
      %s292 = smul.addr %s291, 3
      %s293 = smul.addr %s289, 6
      %s294 = sadd.s32 %s292, %s293
      %s295 = scalar_lea.vmem %s1, %s294
      %s296 = smul.u32 2, %s22
      %p297 = scmp.lt.s32.totalorder %s21, 1
      %s298 = scalar_select %p297, %s21, 1
      %p299 = scmp.lt.s32.totalorder %s296, 3
      %s300 = scalar_select %p299, %s296, 3
      %s301 = smul.addr %s298, 4
      %s302 = sadd.s32 %s300, %s301
      %s303 = smul.addr %s302, 8
      %s304 = scalar_lea.vmem %s4, %s303
      %s305 = smul.u32 2, %s22
      %s306 = smul.u32 2, %s22
      %p307 = scmp.lt.s32.totalorder %s21, 1
      %s308 = scalar_select %p307, %s21, 1
      %p309 = scmp.lt.s32.totalorder %s306, 3
      %s310 = scalar_select %p309, %s306, 3
      %s311 = smul.addr %s308, 4
      %s312 = sadd.s32 %s310, %s311
      %s313 = scalar_lea.vmem %s5, %s312
      %s314 = smul.u32 2, %s22
      %v316 = vld [vmem:[%s287] sm:$0xff]
      %v317 = vld [vmem:[%s287 + $0x8] sm:$0xf]
      %v318 = vld [vmem:[%s295] sm:$0x7]
      %v320 = vlaneseq
      %v321 = vshrl.u32 %v320, 7
      %v322 = vsub.s32 0, %v321
      %v323 = vrot.slane %v318, %v322
      %v324 = vlaneseq
      %v325 = vshrl.u32 %v324, 7
      %v326 = vsub.s32 1, %v325
      %v327 = vrot.slane %v318, %v326
      %v328 = vlaneseq
      %v329 = vshrl.u32 %v328, 7
      %v330 = vsub.s32 2, %v329
      %v331 = vrot.slane %v318, %v330
      %v335 = vpack.c.bf16 %v323, %v323
      %v336 = vpack.c.bf16 %v327, %v327
      %v337 = vpack.c.bf16 %v331, %v331
      %v339 = vpack.i.b16 %v335, %v335
      %v341 = vlaneseq
      %v342 = vshrl.u32 %v341, 7
      %v343 = vsub.s32 0, %v342
      %v344 = vrot.slane %v339, %v343
      %v346 = vpack.i.b16 %v336, %v336
      %v348 = vlaneseq
      %v349 = vshrl.u32 %v348, 7
      %v350 = vsub.s32 0, %v349
      %v351 = vrot.slane %v346, %v350
      %v353 = vpack.i.b16 %v337, %v337
      %v355 = vlaneseq
      %v356 = vshrl.u32 %v355, 7
      %v357 = vsub.s32 0, %v356
      %v358 = vrot.slane %v353, %v357
      %v362 = vunpack.c.l.b16 %v344
      %v363 = vunpack.c.l.b16 %v351
      %v364 = vunpack.c.l.b16 %v358
      %v365 = vpack.c.b16 %v363, %v362
      %v366 = vpack.c.b16 %v364, %v364
      %v369 = vmul.bf16 %v316, %v365
      %v370 = vmul.bf16 %v317, %v366
      %371 = vrot.lane.b32.xlu0 %v318, 127
      %v372 = vpop.permute.xlu0 %371
      %v373 = vrot.slane %v372, 1
      %vm374 = vcmask 1039360
      %v375 = vsel %vm374, %v372, %v373
      %v377 = vadd.f32 %v318, %v375
      %v378 = vmax.f32 %v318, %v375
      %379 = vrot.lane.b32.xlu0 %v318, 126
      %v380 = vpop.permute.xlu0 %379
      %v381 = vrot.slane %v380, 1
      %vm382 = vcmask 1031168
      %v383 = vsel %vm382, %v380, %v381
      %v385 = vadd.f32 %v377, %v383
      %v386 = vmax.f32 %v378, %v383
      %387 = vrot.lane.b32.xlu0 %v318, 96
      %v388 = vpop.permute.xlu0 %387
      %v389 = vrot.slane %v388, 1
      %vm390 = vcmask 785408
      %v391 = vsel %vm390, %v388, %v389
      %v393 = vadd.f32 %v385, %v391
      %v394 = vmax.f32 %v386, %v391
      %395 = vrot.lane.b32.xlu0 %v318, 95
      %v396 = vpop.permute.xlu0 %395
      %v397 = vrot.slane %v396, 1
      %vm398 = vcmask 777216
      %v399 = vsel %vm398, %v396, %v397
      %v401 = vadd.f32 %v393, %v399
      %v402 = vmax.f32 %v394, %v399
      %403 = vrot.lane.b32.xlu0 %v318, 94
      %v404 = vpop.permute.xlu0 %403
      %v405 = vrot.slane %v404, 1
      %vm406 = vcmask 769024
      %v407 = vsel %vm406, %v404, %v405
      %v409 = vadd.f32 %v401, %v407
      %v410 = vmax.f32 %v402, %v407
      %411 = vrot.lane.b32.xlu0 %v318, 64
      %v412 = vpop.permute.xlu0 %411
      %v413 = vrot.slane %v412, 1
      %vm414 = vcmask 523264
      %v415 = vsel %vm414, %v412, %v413
      %v417 = vadd.f32 %v409, %v415
      %v418 = vmax.f32 %v410, %v415
      %419 = vrot.lane.b32.xlu0 %v318, 63
      %v420 = vpop.permute.xlu0 %419
      %v421 = vrot.slane %v420, 1
      %vm422 = vcmask 515072
      %v423 = vsel %vm422, %v420, %v421
      %v425 = vadd.f32 %v417, %v423
      %v426 = vmax.f32 %v418, %v423
      %427 = vrot.lane.b32.xlu0 %v318, 62
      %v428 = vpop.permute.xlu0 %427
      %v429 = vrot.slane %v428, 1
      %vm430 = vcmask 506880
      %v431 = vsel %vm430, %v428, %v429
      %v433 = vadd.f32 %v425, %v431
      %v434 = vmax.f32 %v426, %v431
      %v436 = vunpack.c.l.b16 %v369
      %v437 = vunpack.c.h.b16 %v369
      %v438 = vpack.c.b16 %v436, %v436
      %v439 = vpack.c.b16 %v437, %v437
      %v441 = vunpack.c.l.b16 %v370
      %v442 = vpack.c.b16 %v441, %v441
      %443 = vrot.lane.b32.xlu0 %v438, 127
      %v444 = vpop.permute.xlu0 %443
      %445 = vrot.lane.b32.xlu0 %v439, 127
      %v446 = vpop.permute.xlu0 %445
      %447 = vrot.lane.b32.xlu0 %v442, 127
      %v448 = vpop.permute.xlu0 %447
      %vm449 = vcmask 1039360
      %v450 = vsel %vm449, %v444, %v446
      %v451 = vsel %vm449, %v446, %v448
      %452 = vrot.lane.b32.xlu0 %v438, 126
      %v453 = vpop.permute.xlu0 %452
      %454 = vrot.lane.b32.xlu0 %v439, 126
      %v455 = vpop.permute.xlu0 %454
      %456 = vrot.lane.b32.xlu0 %v442, 126
      %v457 = vpop.permute.xlu0 %456
      %vm458 = vcmask 1031168
      %v459 = vsel %vm458, %v453, %v455
      %v460 = vsel %vm458, %v455, %v457
      %461 = vrot.lane.b32.xlu0 %v438, 96
      %v462 = vpop.permute.xlu0 %461
      %463 = vrot.lane.b32.xlu0 %v439, 96
      %v464 = vpop.permute.xlu0 %463
      %465 = vrot.lane.b32.xlu0 %v442, 96
      %v466 = vpop.permute.xlu0 %465
      %vm467 = vcmask 785408
      %v468 = vsel %vm467, %v462, %v464
      %v469 = vsel %vm467, %v464, %v466
      %470 = vrot.lane.b32.xlu0 %v438, 95
      %v471 = vpop.permute.xlu0 %470
      %472 = vrot.lane.b32.xlu0 %v439, 95
      %v473 = vpop.permute.xlu0 %472
      %474 = vrot.lane.b32.xlu0 %v442, 95
      %v475 = vpop.permute.xlu0 %474
      %vm476 = vcmask 777216
      %v477 = vsel %vm476, %v471, %v473
      %v478 = vsel %vm476, %v473, %v475
      %479 = vrot.lane.b32.xlu0 %v438, 94
      %v480 = vpop.permute.xlu0 %479
      %481 = vrot.lane.b32.xlu0 %v439, 94
      %v482 = vpop.permute.xlu0 %481
      %483 = vrot.lane.b32.xlu0 %v442, 94
      %v484 = vpop.permute.xlu0 %483
      %vm485 = vcmask 769024
      %v486 = vsel %vm485, %v480, %v482
      %v487 = vsel %vm485, %v482, %v484
      %488 = vrot.lane.b32.xlu0 %v438, 64
      %v489 = vpop.permute.xlu0 %488
      %490 = vrot.lane.b32.xlu0 %v439, 64
      %v491 = vpop.permute.xlu0 %490
      %492 = vrot.lane.b32.xlu0 %v442, 64
      %v493 = vpop.permute.xlu0 %492
      %vm494 = vcmask 523264
      %v495 = vsel %vm494, %v489, %v491
      %v496 = vsel %vm494, %v491, %v493
      %497 = vrot.lane.b32.xlu0 %v438, 63
      %v498 = vpop.permute.xlu0 %497
      %499 = vrot.lane.b32.xlu0 %v439, 63
      %v500 = vpop.permute.xlu0 %499
      %501 = vrot.lane.b32.xlu0 %v442, 63
      %v502 = vpop.permute.xlu0 %501
      %vm503 = vcmask 515072
      %v504 = vsel %vm503, %v498, %v500
      %v505 = vsel %vm503, %v500, %v502
      %506 = vrot.lane.b32.xlu0 %v438, 62
      %v507 = vpop.permute.xlu0 %506
      %508 = vrot.lane.b32.xlu0 %v439, 62
      %v509 = vpop.permute.xlu0 %508
      %510 = vrot.lane.b32.xlu0 %v442, 62
      %v511 = vpop.permute.xlu0 %510
      %vm512 = vcmask 506880
      %v513 = vsel %vm512, %v507, %v509
      %v514 = vsel %vm512, %v509, %v511
      %vm515 = vcmask 1043456
      %v518 = vsel %vm515, %v438, %v450
      %v522 = vsel %vm515, %v439, %v451
      %v526 = vsel %vm515, %v459, %v468
      %v530 = vsel %vm515, %v460, %v469
      %v534 = vsel %vm515, %v477, %v486
      %v538 = vsel %vm515, %v478, %v487
      %v542 = vsel %vm515, %v495, %v504
      %v546 = vsel %vm515, %v496, %v505
      %v548 = vld [vmem:[%s2] sm:$0xf]
      %vm549 = vcmask 588800
      %v551 = vsel %vm549, %v548, 0
      %v554 = vsel %vm515, %v513, 0
      %v557 = vsel %vm515, %v514, 0
      %559 = vmatprep.subr.bf16.mxu0 %v522
      %560 = vmatpush1.bf16.msra.mxu0 %v518
      %561 = vmatprep.subr.bf16.mxu0 %v530
      %562 = vmatpush1.bf16.msra.mxu0 %v526
      %563 = vmatprep.subr.bf16.mxu0 %v538
      %564 = vmatpush1.bf16.msra.mxu0 %v534
      %565 = vmatprep.subr.bf16.mxu0 %v546
      %566 = vmatpush1.bf16.msra.mxu0 %v542
      %567 = vmatprep.subr.bf16.mxu0 %v557
      %568 = vmatpush1.bf16.msra.mxu0 %v554
      %569 = vmatprep.subr.bf16.mxu0 0
      %570 = vmatpush1.bf16.msra.mxu0 0
      %571 = vmatprep.subr.bf16.mxu0 0
      %572 = vmatpush1.bf16.msra.mxu0 0
      %573 = vmatprep.subr.bf16.mxu0 0
      %574 = vmatpush1.bf16.msra.mxu0 0
      %575 = vmatprep.subr.bf16.mxu0 0
      %576 = vmatpush1.bf16.msra.mxu0 0
      %577 = vmatprep.subr.bf16.mxu0 0
      %578 = vmatpush1.bf16.msra.mxu0 0
      %579 = vmatprep.subr.bf16.mxu0 0
      %580 = vmatpush1.bf16.msra.mxu0 0
      %581 = vmatprep.subr.bf16.mxu0 0
      %582 = vmatpush1.bf16.msra.mxu0 0
      %583 = vmatprep.subr.bf16.mxu0 0
      %584 = vmatpush1.bf16.msra.mxu0 0
      %585 = vmatprep.subr.bf16.mxu0 0
      %586 = vmatpush1.bf16.msra.mxu0 0
      %587 = vmatprep.subr.bf16.mxu0 0
      %588 = vmatpush1.bf16.msra.mxu0 0
      %589 = vmatprep.subr.bf16.mxu0 0
      %590 = vmatpush1.bf16.msra.mxu0 0
      %591 = vmatprep.mubr.bf16.mxu0 0
      %592 = vmatmul.mubr.bf16.gmra.mrb[0].mxu0 %v551
      %v593 = vpop.f32.mrb[0].mxu0
      %v594 = vadd.f32 0.0, %v593
      %v595 = vpop.f32.mrb[0].mxu0
      %v596 = vadd.f32 0.0, %v595
      %v597 = vpop.f32.mrb[0].mxu0
      %v598 = vpop.f32.mrb[0].mxu0
      %599 = vdwg.mxu0
      %v600 = vmax.f32 %v433, 2.5e-06
      %v601 = vrcp.pop %v600
      %v603 = vlaneseq
      %v604 = vshrl.u32 %v603, 7
      %v605 = vsub.s32 0, %v604
      %v606 = vrot.slane %v601, %v605
      %v607 = vlaneseq
      %v608 = vshrl.u32 %v607, 7
      %v609 = vsub.s32 1, %v608
      %v610 = vrot.slane %v601, %v609
      %v613 = vmul.f32 %v594, %v606
      %v614 = vmul.f32 %v596, %v610
      %v615 = vld [vmem:[%s3] sm:$0xff]
      %617 = vset.pattern.permute.xlu0 0
      %618 = vperm.xlu0 %617, %v615
      %v619 = vpop.permute.xlu0 %618
      %v621 = vadd.f32 %v613, %v619
      %v622 = vadd.f32 %v614, %v619
      %v623 = vmax.f32 %v621, 0.0
      %v624 = vmax.f32 %v622, 0.0
      %625 = vst [vmem:[%s304] sm:$0xff] %v623
      %626 = vst [vmem:[%s304 + $0x8] sm:$0xff] %v624
      %v627 = vlaneseq
      %vm628 = vcmp.ge.s32.totalorder %v627, 0
      %vm629 = vcmp.lt.s32.totalorder %v627, 256
      %vm630 = vmand %vm628, %vm629
      %631 = vst.msk [vmem:[%s313] sm:$0x3] %vm630, %v434
      %s632 = smul.u32 2, %s22
      %p633 = scmp.lt.s32.totalorder %s21, 1
      %s634 = scalar_select %p633, %s21, 1
      %p635 = scmp.lt.s32.totalorder %s632, 3
      %s636 = scalar_select %p635, %s632, 3
      %s637 = smul.addr %s634, 4
      %s638 = sadd.s32 %s636, %s637
      %s639 = smul.addr %s638, 8
      %s640 = scalar_lea.vmem %s4, %s639
      %s641 = smul.u32 2, %s22
      %p642 = scmp.lt.s32.totalorder %s21, 1
      %s643 = scalar_select %p642, %s21, 1
      %p644 = scmp.lt.s32.totalorder %s641, 3
      %s645 = scalar_select %p644, %s641, 3
      %s646 = smul.addr %s643, 4
      %s647 = sadd.s32 %s645, %s646
      %s648 = scalar_lea.vmem %s5, %s647
      // Predicated region
      $region37: #{sparse_conv_block.1} parent=35 // pred_check
        %p649 = pneg %p147
      $region38: #{sparse_conv_block.1} parent=35 // pred_check_branch
        %651 = sbr.rel (%p649) target = $region40
      $region39: #{sparse_conv_block.1} parent=35 // pred_region
        %s652 = smul.u32 2, %s22
      $region40: #{sparse_conv_block.1} parent=35 // pred_fallthru
        _
      // Predicated region
      $region41: #{sparse_conv_block.1} parent=35 // pred_check
        %p653 = pneg %p175
      $region42: #{sparse_conv_block.1} parent=35 // pred_check_branch
        %655 = sbr.rel (%p653) target = $region44
      $region43: #{sparse_conv_block.1} parent=35 // pred_region
        %s656 = smul.u32 2, %s22
      $region44: #{sparse_conv_block.1} parent=35 // pred_fallthru
        _
    $region36: #{sparse_conv_block.1} parent=5 // pred_fallthru
      _
    %p657 = scmp.le.s32.totalorder 2, %s12
    // Predicated region
    $region45: #{sparse_conv_block.1} parent=5 // pred_check
      %p658 = pneg %p657
    $region46: #{sparse_conv_block.1} parent=5 // pred_check_branch
      %660 = sbr.rel (%p658) target = $region48
    $region47: #{sparse_conv_block.1} parent=5 // pred_region
      %s661 = ssub.s32 %s12, 2
      // Predicated region
      $region49: #{sparse_conv_block.1} parent=47 // pred_check
        %p662 = pneg %p153
      $region50: #{sparse_conv_block.1} parent=47 // pred_check_branch
        %664 = sbr.rel (%p662) target = $region52
      $region51: #{sparse_conv_block.1} parent=47 // pred_region
        %s665 = smul.u32 2, %s24
        %p666 = scmp.lt.s32.totalorder %s23, 1
        %s667 = scalar_select %p666, %s23, 1
        %p668 = scmp.lt.s32.totalorder %s665, 3
        %s669 = scalar_select %p668, %s665, 3
        %s670 = smul.addr %s667, 4
        %s671 = sadd.s32 %s669, %s670
        %s672 = smul.addr %s671, 8
        %s673 = scalar_lea.vmem %s4, %s672
      $region52: #{sparse_conv_block.1} parent=47 // pred_fallthru
        _
      // Predicated region
      $region53: #{sparse_conv_block.1} parent=47 // pred_check
        %p674 = pneg %p181
      $region54: #{sparse_conv_block.1} parent=47 // pred_check_branch
        %676 = sbr.rel (%p674) target = $region56
      $region55: #{sparse_conv_block.1} parent=47 // pred_region
        %s677 = smul.u32 2, %s24
        %p678 = scmp.lt.s32.totalorder %s23, 1
        %s679 = scalar_select %p678, %s23, 1
        %p680 = scmp.lt.s32.totalorder %s677, 3
        %s681 = scalar_select %p680, %s677, 3
        %s682 = smul.addr %s679, 4
        %s683 = sadd.s32 %s681, %s682
        %s684 = scalar_lea.vmem %s5, %s683
      $region56: #{sparse_conv_block.1} parent=47 // pred_fallthru
        _
    $region48: #{sparse_conv_block.1} parent=5 // pred_fallthru
      _
  $region6: #{sparse_conv_block.1} parent=0 // loop_footer
    %s16 = sadd.s32 1, %s12
  $region7: #{sparse_conv_block.1} parent=0 // loop_footer_branch
    %11 = sbr.rel target = $region3
  $region8: #{sparse_conv_block.1} parent=0 // loop_exit
    _

</llo_original>
